<compile_context>
chip_gen: v6e
topology: v6e:2x2x1
jax: 0.10.0
libtpu: 0.0.40
codegen_flags: <defaults>
</compile_context>

<pallas_src>
import functools

import jax
import jax.numpy as jnp
from jax.experimental import pallas as pl
from jax.experimental.pallas import tpu as pltpu


def _label_smoothing_loss_kernel(
    pred_ref, target_ref, out_ref,
    *, n_total, c_total, tile_n, smoothing, confidence, needs_mask,
):
    step = pl.program_id(0)

    x = pred_ref[...].astype(jnp.float32)          # (tile_n, C), cast in VMEM
    tgt = target_ref[...]                          # (tile_n, 1) int32
    tn, c = x.shape

    # --- log_softmax pieces over the class axis (dim=1), numerically stable ---
    m = jnp.max(x, axis=1, keepdims=True)
    z = x - m                                      # z <= 0
    ez = jnp.exp(z)                                # single exp per element, reused
    se = jnp.sum(ez, axis=1, keepdims=True)
    log_se = jnp.log(se)                           # per-row
    prob = ez * (1.0 / se)                         # = exp(log_softmax), in (0, 1]

    # --- row-level pieces of sum_j(-lp_j * y_j) (the scatter_'d smoothed target) ---
    # y_j = off_val for j != target, confidence for j == target, so
    #   sum_j(-lp_j*y_j) = -off_val*rowsum(lp) - (confidence-off_val)*lp[target]
    # with lp = z - log_se  =>  rowsum(lp) = rowsum(z) - C*log_se, lp[target] = z[target]-log_se.
    col = jax.lax.broadcasted_iota(jnp.int32, (tn, c), 1)
    z_t = jnp.sum(jnp.where(col == tgt, z, 0.0), axis=1, keepdims=True)
    rowsum_z = jnp.sum(z, axis=1, keepdims=True)
    # BCEWithLogits(lp, y) per element, using lp <= 0:
    #   elem = -lp*y + log1p(exp(lp)) = -lp*y + log1p(prob)
    l1p = jnp.sum(jnp.log1p(prob), axis=1, keepdims=True)

    off_val = jnp.float32(smoothing / (c_total - 1))
    conf = jnp.float32(confidence)

    rowsum_lp = rowsum_z - jnp.float32(c_total) * log_se
    lp_t = z_t - log_se
    bce_rows = -(off_val * rowsum_lp + (conf - off_val) * lp_t) + l1p   # (tn, 1)

    if needs_mask:
        # Per-row select (not a multiply) so NaN/garbage in DMA-padded tail rows
        # is discarded exactly. Cost is per-row, negligible vs. per-element work.
        row = step * tile_n + jax.lax.broadcasted_iota(jnp.int32, (tn, 1), 0)
        bce_rows = jnp.where(row < n_total, bce_rows, 0.0)

    # One scalar partial per grid step, broadcast into a lane-dense (1,8,128) block
    # (unmasked vst). The wrapper reads [:, 0, 0] and does the final sum / divide.
    partial = jnp.sum(bce_rows)
    out_ref[...] = jnp.full(out_ref.shape, partial, jnp.float32)


def _choose_tile_n(n, c, itemsize):
    """Row-tile size from a VMEM byte budget.

    Targets ~2 MiB for the f32 working tile (a handful of full-tile f32 temporaries
    are live in VMEM) and ~2 MiB per (double-buffered) input block, well inside even
    v7x's 64 MiB VMEM with headroom for compiler scratch.
    """
    sub = 16 if itemsize == 2 else 8            # bf16 sublane packing
    f32_budget = 2 * 1024 * 1024                # per full-tile f32 temporary
    in_budget = 4 * 1024 * 1024                 # input block, double-buffered total
    by_f32 = max(1, f32_budget // (c * 4))
    by_in = max(1, in_budget // (c * itemsize * 2))
    tile = min(by_f32, by_in)
    tile = max(sub, (tile // sub) * sub)        # sublane-aligned when tiling
    if tile >= n:
        return n                                # single block == full dim (always legal)
    return tile


def _vmem_limit_bytes():
    """Generation-aware VMEM limit: ~3/4 of physical capacity, capped at 96 MiB.

    Falls back to a conservative 48 MiB (safe on v7x's 64 MiB) if the query fails.
    """
    cap = None
    try:
        cap = getattr(pltpu.get_tpu_info(), "vmem_capacity_bytes", None)
    except Exception:
        cap = None
    if not cap:
        return 48 * 1024 * 1024
    return int(min(int(cap) * 3 // 4, 96 * 1024 * 1024))


def label_smoothing_loss(pred, target, smoothing=0.1, tile_n=None):
    """pred: (N, C) float (any float dtype; bf16 recommended on v5e/v6e),
    target: (N,) int class indices. Returns scalar f32 loss identical to the
    PyTorch module's forward.
    """
    n, c = pred.shape
    confidence = 1.0 - smoothing
    # Note: like the PyTorch module, C == 1 is degenerate (smoothing / (C-1)).
    itemsize = jnp.dtype(pred.dtype).itemsize

    if tile_n is None:
        tile_n = _choose_tile_n(n, c, itemsize)
    tile_n = int(tile_n)
    grid_n = pl.cdiv(n, tile_n)
    needs_mask = (n % tile_n) != 0

    target2d = target.reshape(n, 1).astype(jnp.int32)

    kernel = functools.partial(
        _label_smoothing_loss_kernel,
        n_total=n, c_total=c, tile_n=tile_n,
        smoothing=float(smoothing), confidence=float(confidence),
        needs_mask=needs_mask,
    )

    partials = pl.pallas_call(
        kernel,
        out_shape=jax.ShapeDtypeStruct((grid_n, 8, 128), jnp.float32),
        grid_spec=pltpu.PrefetchScalarGridSpec(
            num_scalar_prefetch=0,
            grid=(grid_n,),
            in_specs=[
                pl.BlockSpec((tile_n, c), lambda i: (i, 0)),   # pred row tile (native dtype)
                pl.BlockSpec((tile_n, 1), lambda i: (i, 0)),   # target column tile
            ],
            # One lane-dense (8,128) partial block per grid step -> no carried state.
            out_specs=pl.BlockSpec((1, 8, 128), lambda i: (i, 0, 0)),
        ),
        compiler_params=pltpu.CompilerParams(
            dimension_semantics=("parallel",),   # independent row tiles: both TCs on v7x
            vmem_limit_bytes=_vmem_limit_bytes(),
        ),
    )(pred, target2d)

    # Tiny final reduction (grid_n scalars) + mean divisor in plain JAX.
    return jnp.sum(partials[:, 0, 0]) / jnp.float32(n * c)


def _reference(pred, target, smoothing=0.1):
    # Pure-JAX reference mirroring the torch code, for a sanity check only.
    confidence = 1.0 - smoothing
    n, c = pred.shape
    log_probs = jax.nn.log_softmax(pred.astype(jnp.float32), axis=1)
    true_dist = jnp.full((n, c), smoothing / (c - 1), dtype=jnp.float32)
    true_dist = true_dist.at[jnp.arange(n), target].set(confidence)
    x = log_probs
    y = true_dist
    elem = jnp.maximum(x, 0.0) - x * y + jnp.log1p(jnp.exp(-jnp.abs(x)))
    return jnp.mean(elem)


if __name__ == "__main__":
    key = jax.random.PRNGKey(0)
    k1, k2, k3, k4, k5, k6 = jax.random.split(key, 6)

    # Test 1: small shape, single tile (batch=8, classes=32).
    N, C = 8, 32
    pred = jax.random.normal(k1, (N, C), dtype=jnp.float32)
    target = jax.random.randint(k2, (N,), 0, C, dtype=jnp.int32)
    loss = jax.block_until_ready(label_smoothing_loss(pred, target, smoothing=0.1))
    ref = _reference(pred, target, smoothing=0.1)
    assert jnp.allclose(loss, ref, atol=1e-5, rtol=1e-5), (loss, ref)

    # Test 2: multi-tile grid with a masked tail (N=20 with tile_n=8 -> 3 grid steps).
    N2, C2 = 20, 160
    pred2 = jax.random.normal(k3, (N2, C2), dtype=jnp.float32)
    target2 = jax.random.randint(k4, (N2,), 0, C2, dtype=jnp.int32)
    loss2 = jax.block_until_ready(
        label_smoothing_loss(pred2, target2, smoothing=0.1, tile_n=8))
    ref2 = _reference(pred2, target2, smoothing=0.1)
    assert jnp.allclose(loss2, ref2, atol=1e-5, rtol=1e-5), (loss2, ref2)

    # Test 3: bf16 input contract (halves HBM traffic on v5e/v6e; cast to f32 in VMEM).
    N3, C3 = 32, 256
    pred3 = jax.random.normal(k5, (N3, C3), dtype=jnp.bfloat16)
    target3 = jax.random.randint(k6, (N3,), 0, C3, dtype=jnp.int32)
    loss3 = jax.block_until_ready(label_smoothing_loss(pred3, target3, smoothing=0.1))
    ref3 = _reference(pred3, target3, smoothing=0.1)
    assert jnp.allclose(loss3, ref3, atol=1e-4, rtol=1e-4), (loss3, ref3)

    print("KERNEL_OK")
</pallas_src>

<mosaic_0001>
module attributes {stable_mosaic.version = 11 : i64} {
  func.func @_label_smoothing_loss_kernel(%arg0: i32, %arg1: memref<8x32xf32, #tpu.memory_space<vmem>>, %arg2: memref<8x1xi32, #tpu.memory_space<vmem>>, %arg3: memref<1x8x128xf32, #tpu.memory_space<vmem>>) attributes {dimension_semantics = [#tpu.dimension_semantics<parallel>], iteration_bounds = array<i64: 1>, scalar_prefetch = 0 : i64, scratch_operands = 0 : i64, tpu.core_type = #tpu.core_type<tc>, window_params = [{transform_indices = @transform_0, window_bounds = array<i64: 8, 32>}, {transform_indices = @transform_1, window_bounds = array<i64: 8, 1>}, {transform_indices = @transform_2, window_bounds = array<i64: 1, 8, 128>}]} {
    %c0 = arith.constant 0 : index
    %c0_0 = arith.constant 0 : index
    %0 = vector.load %arg1[%c0, %c0_0] : memref<8x32xf32, #tpu.memory_space<vmem>>, vector<8x32xf32>
    %c0_1 = arith.constant 0 : index
    %c0_2 = arith.constant 0 : index
    %1 = vector.load %arg2[%c0_1, %c0_2] : memref<8x1xi32, #tpu.memory_space<vmem>>, vector<8x1xi32>
    %cst = arith.constant dense<0xFF800000> : vector<8xf32>
    %2 = vector.multi_reduction <maximumf>, %0, %cst [1] : vector<8x32xf32> to vector<8xf32>
    %3 = vector.shape_cast %2 : vector<8xf32> to vector<8x1xf32>
    %4 = vector.broadcast %3 : vector<8x1xf32> to vector<8x32xf32>
    %5 = arith.subf %0, %4 : vector<8x32xf32>
    %6 = math.exp %5 : vector<8x32xf32>
    %cst_3 = arith.constant dense<0.000000e+00> : vector<8xf32>
    %7 = vector.multi_reduction <add>, %6, %cst_3 [1] : vector<8x32xf32> to vector<8xf32>
    %8 = vector.shape_cast %7 : vector<8xf32> to vector<8x1xf32>
    %9 = math.log %8 : vector<8x1xf32>
    %cst_4 = arith.constant 1.000000e+00 : f32
    %10 = vector.broadcast %cst_4 : f32 to vector<8x1xf32>
    %11 = arith.divf %10, %8 : vector<8x1xf32>
    %12 = vector.broadcast %11 : vector<8x1xf32> to vector<8x32xf32>
    %13 = arith.mulf %6, %12 : vector<8x32xf32>
    %14 = tpu.iota {dimensions = array<i32: 1>} : vector<8x32xi32>
    %15 = vector.broadcast %1 : vector<8x1xi32> to vector<8x32xi32>
    %16 = arith.cmpi eq, %14, %15 : vector<8x32xi32>
    %cst_5 = arith.constant 0.000000e+00 : f32
    %17 = vector.broadcast %cst_5 : f32 to vector<8x32xf32>
    %18 = arith.select %16, %5, %17 : vector<8x32xi1>, vector<8x32xf32>
    %cst_6 = arith.constant dense<0.000000e+00> : vector<8xf32>
    %19 = vector.multi_reduction <add>, %18, %cst_6 [1] : vector<8x32xf32> to vector<8xf32>
    %20 = vector.shape_cast %19 : vector<8xf32> to vector<8x1xf32>
    %cst_7 = arith.constant dense<0.000000e+00> : vector<8xf32>
    %21 = vector.multi_reduction <add>, %5, %cst_7 [1] : vector<8x32xf32> to vector<8xf32>
    %22 = vector.shape_cast %21 : vector<8xf32> to vector<8x1xf32>
    %23 = math.log1p %13 : vector<8x32xf32>
    %cst_8 = arith.constant dense<0.000000e+00> : vector<8xf32>
    %24 = vector.multi_reduction <add>, %23, %cst_8 [1] : vector<8x32xf32> to vector<8xf32>
    %25 = vector.shape_cast %24 : vector<8xf32> to vector<8x1xf32>
    %cst_9 = arith.constant 3.200000e+01 : f32
    %26 = vector.broadcast %cst_9 : f32 to vector<8x1xf32>
    %27 = arith.mulf %26, %9 : vector<8x1xf32>
    %28 = arith.subf %22, %27 : vector<8x1xf32>
    %29 = arith.subf %20, %9 : vector<8x1xf32>
    %cst_10 = arith.constant 0.0032258064 : f32
    %30 = vector.broadcast %cst_10 : f32 to vector<8x1xf32>
    %31 = arith.mulf %30, %28 : vector<8x1xf32>
    %cst_11 = arith.constant 0.899999976 : f32
    %cst_12 = arith.constant 0.0032258064 : f32
    %32 = arith.subf %cst_11, %cst_12 : f32
    %33 = vector.broadcast %32 : f32 to vector<8x1xf32>
    %34 = arith.mulf %33, %29 : vector<8x1xf32>
    %35 = arith.addf %31, %34 : vector<8x1xf32>
    %cst_13 = arith.constant 0.000000e+00 : f32
    %36 = vector.broadcast %cst_13 : f32 to vector<8x1xf32>
    %37 = arith.subf %36, %35 : vector<8x1xf32>
    %38 = arith.addf %37, %25 : vector<8x1xf32>
    %39 = vector.shape_cast %38 : vector<8x1xf32> to vector<1x8x1xf32>
    %cst_14 = arith.constant dense<0.000000e+00> : vector<1xf32>
    %40 = vector.multi_reduction <add>, %39, %cst_14 [1, 2] : vector<1x8x1xf32> to vector<1xf32>
    %41 = vector.shape_cast %40 : vector<1xf32> to vector<1x1x1xf32>
    %42 = vector.extract %41[0, 0, 0] : f32 from vector<1x1x1xf32>
    %43 = vector.broadcast %42 : f32 to vector<1x8x128xf32>
    %c0_15 = arith.constant 0 : index
    %c0_16 = arith.constant 0 : index
    %c0_17 = arith.constant 0 : index
    %44 = vector.load %arg3[%c0_15, %c0_16, %c0_17] : memref<1x8x128xf32, #tpu.memory_space<vmem>>, vector<1x8x128xf32>
    tpu.vector_store %arg3[%c0_15, %c0_16, %c0_17], %43 {strides = array<i32>} : memref<1x8x128xf32, #tpu.memory_space<vmem>>, vector<1x8x128xf32>,
    return
  }
  func.func @transform_0(%arg0: i32) -> (i32, i32) {
    %c0_i32 = arith.constant 0 : i32
    %c0_i32_0 = arith.constant 0 : i32
    return %arg0, %c0_i32 : i32, i32
  }
  func.func @transform_1(%arg0: i32) -> (i32, i32) {
    %c0_i32 = arith.constant 0 : i32
    %c0_i32_0 = arith.constant 0 : i32
    return %arg0, %c0_i32 : i32, i32
  }
  func.func @transform_2(%arg0: i32) -> (i32, i32, i32) {
    %c0_i32 = arith.constant 0 : i32
    %c0_i32_0 = arith.constant 0 : i32
    %c0_i32_1 = arith.constant 0 : i32
    return %arg0, %c0_i32, %c0_i32_0 : i32, i32, i32
  }
}

</mosaic_0001>

<llo_original>
// kernel: tpu_custom_call.1
$region0: #{tpu_custom_call.1}
  #allocation0 [shape = 'u32[]', space=smem, size = 0x4, offset = 0x4, fixed_abs, tag = 'smem constant byte address 0x4 - core index']
  #allocation1 [shape = 'u32[144,128]{1,0:T(1,128)}', space=vmem, size = 0x12000, scoped, tag = 'internal scratch']
  %s0 = inlined_call_operand.vmem [shape: f32[8,32], index: 0, kind: input, shape index: {}]
  %s1 = inlined_call_operand.vmem [shape: s32[8,1], index: 1, kind: input, shape index: {}]
  %s2 = inlined_call_operand.hbm [shape: f32[1,8,128], index: 2, kind: output, shape index: {}]
  %s3 = sld [smem:[#allocation0]]
  $region18: #{tpu_custom_call.1} parent=0
    _
  %s5 = ssub.s32 1, %s3
  %s6 = scalar_select 0, %s5, %s3
  $region1: #{tpu_custom_call.1} parent=0
    #allocation2 [shape = 'u8[4096]{0}', space=vmem, size = 0x1000, scoped, tag = 'output window, operand 0, single buffered']
    #allocation3 [shape = 's32[1]{0}', space=sflag, size = 0x4, scoped, tag = 'scoped memory for tpu_custom_call.1']
    %7 = vsyncpa [#allocation3], 0
    // Predicated region
    $region2: #{tpu_custom_call.1} parent=1 // pred_check
      _
    $region3: #{tpu_custom_call.1} parent=1 // pred_check_branch
      %9 = sbr.rel (0) target = $region5
    $region4: #{tpu_custom_call.1} parent=1 // pred_region
      _
    $region5: #{tpu_custom_call.1} parent=1 // pred_fallthru
      _
    // Predicated region
    $region6: #{tpu_custom_call.1} parent=1 // pred_check
      _
    $region7: #{tpu_custom_call.1} parent=1 // pred_check_branch
      %11 = sbr.rel (0) target = $region9
    $region8: #{tpu_custom_call.1} parent=1 // pred_region
      _
    $region9: #{tpu_custom_call.1} parent=1 // pred_fallthru
      _
    %v12 = vld [vmem:[%s0] sm:$0xff]
    %v13 = vld [vmem:[%s1] sm:$0xff]
    %vm14 = vcmask 261120
    %v15 = vsel %vm14, %v12, -inf
    %16 = vmax.xlane.f32.xlu0 %v15
    %v17 = vpop.xlane.xlu0 %16
    %v18 = vsub.f32 %v12, %v17
    %v19 = vmul.f32 %v18, 1.442695
    %v20 = vpow.pop %v19
    %v21 = vsel %vm14, %v20, 0.0
    %22 = vadd.xlane.f32.xlu0 %v21
    %v23 = vpop.xlane.xlu0 %22
    %v24 = vlog2.pop %v23
    %v25 = vmul.f32 %v24, 0.6931472
    %v26 = vrcp.pop %v23
    %v27 = vmul.f32 1.0, %v26
    %v28 = vmul.f32 %v20, %v27
    %v29 = vlaneseq
    %v30 = vand.u32 %v29, 127
    %31 = vset.pattern.permute.xlu0 0
    %32 = vperm.xlu0 %31, %v13
    %v33 = vpop.permute.xlu0 %32
    %vm34 = vcmp.eq.s32.totalorder %v30, %v33
    %v35 = vsel %vm34, %v18, 0.0
    %v36 = vsel %vm14, %v35, 0.0
    %37 = vadd.xlane.f32.xlu0 %v36
    %v38 = vpop.xlane.xlu0 %37
    %v39 = vsel %vm14, %v18, 0.0
    %40 = vadd.xlane.f32.xlu0 %v39
    %v41 = vpop.xlane.xlu0 %40
    %v42 = vadd.f32 %v28, 1.0
    %v43 = vlog2.pop %v42
    %v44 = vmul.f32 %v43, 0.6931472
    %v45 = vmul.f32 -0.5, %v28
    %v46 = vadd.f32 %v45, 1.0
    %v47 = vmul.f32 %v46, %v28
    %v48 = vand.u32 2147483647, %v28
    %vm49 = vcmp.lt.f32.partialorder %v48, 0.0004427343
    %v50 = vsel %vm49, %v47, %v44
    %v51 = vsel %vm14, %v50, 0.0
    %52 = vadd.xlane.f32.xlu0 %v51
    %v53 = vpop.xlane.xlu0 %52
    %v54 = vmul.f32 %v25, 32.0
    %v55 = vsub.f32 %v41, %v54
    %v56 = vsub.f32 %v38, %v25
    %v57 = vmul.f32 %v55, 0.0032258064
    %v58 = vmul.f32 %v56, 0.8967742
    %v59 = vadd.f32 %v57, %v58
    %v60 = vsub.f32 0.0, %v59
    %v61 = vadd.f32 %v60, %v53
    %vm62 = vcmask 7168
    %v63 = vsel %vm62, %v61, 0.0
    %64 = vadd.xlane.f32.xlu0 %v63
    %v65 = vpop.xlane.xlu0 %64
    %v66 = vrot.slane %v65, 4
    %v67 = vadd.f32 %v65, %v66
    %v68 = vrot.slane %v67, 2
    %v69 = vadd.f32 %v67, %v68
    %v70 = vrot.slane %v69, 1
    %v71 = vadd.f32 %v69, %v70
    %s72 = vtos %v71
    %v73 = vstv %s72
    %74 = vst [vmem:[#allocation2] sm:$0xff] %v73
    // Predicated region
    $region10: #{tpu_custom_call.1} parent=1 // pred_check
      _
    $region11: #{tpu_custom_call.1} parent=1 // pred_check_branch
      %76 = sbr.rel (0) target = $region13
    $region12: #{tpu_custom_call.1} parent=1 // pred_region
      %s78 = ssub.s32 128, 128
      %79 = vsyncadd [#allocation3], %s78
      %s81 = sshll.u32 [#allocation2], 4
      %s82 = int_to_ptr.vmem [resolvable:$true] %s81
      %84 = dma.vmem_to_hbm [thread:$0]  %s82, 128, %s2, [#allocation3]
    $region13: #{tpu_custom_call.1} parent=1 // pred_fallthru
      _
    // Predicated region
    $region14: #{tpu_custom_call.1} parent=1 // pred_check
      _
    $region15: #{tpu_custom_call.1} parent=1 // pred_check_branch
      %86 = sbr.rel (0) target = $region17
    $region16: #{tpu_custom_call.1} parent=1 // pred_region
      %87 = dma.done [#allocation3], 128
    $region17: #{tpu_custom_call.1} parent=1 // pred_fallthru
      _
    %88 = vsyncpa [#allocation3], 1

</llo_original>
